<compile_context>
chip_gen: v5e
topology: v5e:2x2
jax: 0.10.0
libtpu: 0.0.40
codegen_flags: <defaults>
</compile_context>

<pallas_src>
import jax
import jax.numpy as jnp
from jax.experimental import pallas as pl
from jax.experimental.pallas import tpu as pltpu

_BF16 = 2  # bytes
_F32 = 4   # bytes


def _merge_mix_kernel(x1_ref, x2_ref, w1t_ref, w2t_ref, b_ref, o_ref):
    # Two MXU matmuls: bf16 operands, f32 accumulation.
    h = jnp.dot(x1_ref[...], w1t_ref[...], preferred_element_type=jnp.float32)
    h = h + jnp.dot(x2_ref[...], w2t_ref[...], preferred_element_type=jnp.float32)
    # Pre-summed bias: (1, tile_d3) row, implicit broadcast on the VPU.
    h = h + b_ref[...]
    # LeakyReLU(negative_slope=0.5) == max(h, 0.5*h): mul + max, no select.
    o_ref[...] = jnp.maximum(h, 0.5 * h).astype(o_ref.dtype)


def _round_up(x, m):
    return ((x + m - 1) // m) * m


def _vmem_budget_bytes():
    cap = 128 * 1024 * 1024
    try:
        info = pltpu.get_tpu_info()
        cap = int(getattr(info, "vmem_capacity_bytes", cap)) or cap
    except Exception:
        pass
    # Leave headroom for Mosaic-internal scratch and pipelining slop.
    return max(16 * 1024 * 1024, int(cap * 0.7))


def merge_layer_mix_forward(x1, x2, w1, b1, w2, b2):
    """h = LeakyReLU(x1 @ w1.T + b1 + x2 @ w2.T + b2, slope=0.5); shape (N, dim3)."""
    n, d1 = x1.shape
    n2, d2 = x2.shape
    assert n2 == n
    d3, d1w = w1.shape
    assert d1w == d1
    assert w2.shape == (d3, d2)
    assert b1.shape == (d3,) and b2.shape == (d3,)

    kdim = d1 + d2
    budget = _vmem_budget_bytes()

    # ---- d3 tiling: keep full weights resident if they fit half the budget,
    # ---- otherwise split d3 into 128-multiple tiles (second parallel grid axis).
    d3_pad = _round_up(d3, 128)
    tile_d3 = d3_pad
    while 2 * kdim * tile_d3 * _BF16 > budget // 2 and tile_d3 > 128:
        tile_d3 = _round_up(tile_d3 // 2, 128)
    d3_pad = _round_up(d3_pad, tile_d3)

    # ---- Row tile from the remaining VMEM budget (2 pipeline buffers each).
    fixed_bytes = 2 * (kdim * tile_d3 * _BF16 + tile_d3 * _F32)      # weights + bias
    per_row_bytes = 2 * (kdim * _BF16 + tile_d3 * _F32)              # x1/x2 in, out
    tile_n = (budget - fixed_bytes) // max(per_row_bytes, 1)
    tile_n = max(16, min((tile_n // 16) * 16, 2048))
    # Keep at least two row tiles when the batch allows it (v7x two TensorCores).
    tile_n = min(tile_n, max(16, _round_up(pl.cdiv(n, 2), 16)))
    # Never larger than the (16-padded) batch.
    tile_n = min(tile_n, _round_up(n, 16))

    n_pad = _round_up(n, tile_n)

    # ---- One-time layout plumbing / casts in the wrapper.
    x1p = jnp.asarray(x1, jnp.bfloat16)
    x2p = jnp.asarray(x2, jnp.bfloat16)
    if n_pad != n:
        x1p = jnp.pad(x1p, ((0, n_pad - n), (0, 0)))
        x2p = jnp.pad(x2p, ((0, n_pad - n), (0, 0)))

    w1t = jnp.asarray(w1, jnp.float32).T.astype(jnp.bfloat16)        # (d1, d3)
    w2t = jnp.asarray(w2, jnp.float32).T.astype(jnp.bfloat16)        # (d2, d3)
    b = (jnp.asarray(b1, jnp.float32) + jnp.asarray(b2, jnp.float32)).reshape(1, d3)
    if d3_pad != d3:
        w1t = jnp.pad(w1t, ((0, 0), (0, d3_pad - d3)))
        w2t = jnp.pad(w2t, ((0, 0), (0, d3_pad - d3)))
        b = jnp.pad(b, ((0, 0), (0, d3_pad - d3)))

    grid = (n_pad // tile_n, d3_pad // tile_d3)

    # ---- VMEM limit: never below the actual requirement, generation-aware cap.
    needed = fixed_bytes + 2 * tile_n * (kdim * _BF16 + tile_d3 * _F32)
    vmem_limit = int(max(min(budget, 100 * 1024 * 1024), needed + (2 << 20)))

    cost = pl.CostEstimate(
        flops=2 * n_pad * d3_pad * kdim,
        transcendentals=0,
        bytes_accessed=(n_pad * kdim * _BF16 + kdim * d3_pad * _BF16
                        + d3_pad * _F32 + n_pad * d3_pad * _F32),
    )
    cparams = pltpu.CompilerParams(
        dimension_semantics=("parallel", "parallel"),
        vmem_limit_bytes=vmem_limit,
    )

    out = pl.pallas_call(
        _merge_mix_kernel,
        out_shape=jax.ShapeDtypeStruct((n_pad, d3_pad), jnp.float32),
        grid=grid,
        in_specs=[
            pl.BlockSpec((tile_n, d1), lambda i, j: (i, 0)),
            pl.BlockSpec((tile_n, d2), lambda i, j: (i, 0)),
            pl.BlockSpec((d1, tile_d3), lambda i, j: (0, j)),
            pl.BlockSpec((d2, tile_d3), lambda i, j: (0, j)),
            pl.BlockSpec((1, tile_d3), lambda i, j: (0, j)),
        ],
        out_specs=pl.BlockSpec((tile_n, tile_d3), lambda i, j: (i, j)),
        compiler_params=cparams,
        cost_estimate=cost,
    )(x1p, x2p, w1t, w2t, b)

    return out[:n, :d3]


def _reference(x1, x2, w1, b1, w2, b2):
    h = x1 @ w1.T + b1 + x2 @ w2.T + b2
    return jnp.where(h >= 0.0, h, 0.5 * h)


if __name__ == "__main__":
    # Small shapes consistent with the module: batch N, dim1/dim2 input
    # features, dim3 shared output features.
    N, DIM1, DIM2, DIM3 = 8, 32, 16, 64

    key = jax.random.PRNGKey(0)
    k_x1, k_x2, k_w1, k_b1, k_w2, k_b2 = jax.random.split(key, 6)

    x1 = jax.random.normal(k_x1, (N, DIM1), dtype=jnp.float32)
    x2 = jax.random.normal(k_x2, (N, DIM2), dtype=jnp.float32)

    # fc1: Linear(dim1, dim3), xavier_normal_ weight; default bias init
    # U(-1/sqrt(fan_in), 1/sqrt(fan_in)).
    std1 = (2.0 / (DIM1 + DIM3)) ** 0.5
    w1 = std1 * jax.random.normal(k_w1, (DIM3, DIM1), dtype=jnp.float32)
    bound1 = 1.0 / (DIM1 ** 0.5)
    b1 = jax.random.uniform(k_b1, (DIM3,), minval=-bound1, maxval=bound1,
                            dtype=jnp.float32)

    # fc2: Linear(dim2, dim3), xavier_normal_ weight.
    std2 = (2.0 / (DIM2 + DIM3)) ** 0.5
    w2 = std2 * jax.random.normal(k_w2, (DIM3, DIM2), dtype=jnp.float32)
    bound2 = 1.0 / (DIM2 ** 0.5)
    b2 = jax.random.uniform(k_b2, (DIM3,), minval=-bound2, maxval=bound2,
                            dtype=jnp.float32)

    h = merge_layer_mix_forward(x1, x2, w1, b1, w2, b2)
    jax.block_until_ready(h)

    ref = _reference(x1, x2, w1, b1, w2, b2)
    assert h.shape == (N, DIM3), h.shape
    # bf16 MXU operands with f32 accumulation -> slightly looser tolerance.
    assert jnp.allclose(h, ref, rtol=2e-2, atol=2e-2), (h, ref)

    print("KERNEL_OK")
</pallas_src>

<mosaic_0001>
module attributes {stable_mosaic.version = 11 : i64} {
  func.func @_merge_mix_kernel(%arg0: i32, %arg1: i32, %arg2: memref<16x32xbf16, #tpu.memory_space<vmem>>, %arg3: memref<16x16xbf16, #tpu.memory_space<vmem>>, %arg4: memref<32x128xbf16, #tpu.memory_space<vmem>>, %arg5: memref<16x128xbf16, #tpu.memory_space<vmem>>, %arg6: memref<1x128xf32, #tpu.memory_space<vmem>>, %arg7: memref<16x128xf32, #tpu.memory_space<vmem>>) attributes {dimension_semantics = [#tpu.dimension_semantics<parallel>, #tpu.dimension_semantics<parallel>], iteration_bounds = array<i64: 1, 1>, scalar_prefetch = 0 : i64, scratch_operands = 0 : i64, tpu.core_type = #tpu.core_type<tc>, window_params = [{transform_indices = @transform_0, window_bounds = array<i64: 16, 32>}, {transform_indices = @transform_1, window_bounds = array<i64: 16, 16>}, {transform_indices = @transform_2, window_bounds = array<i64: 32, 128>}, {transform_indices = @transform_3, window_bounds = array<i64: 16, 128>}, {transform_indices = @transform_4, window_bounds = array<i64: 1, 128>}, {transform_indices = @transform_5, window_bounds = array<i64: 16, 128>}]} {
    %c0 = arith.constant 0 : index
    %c0_0 = arith.constant 0 : index
    %0 = vector.load %arg2[%c0, %c0_0] : memref<16x32xbf16, #tpu.memory_space<vmem>>, vector<16x32xbf16>
    %c0_1 = arith.constant 0 : index
    %c0_2 = arith.constant 0 : index
    %1 = vector.load %arg4[%c0_1, %c0_2] : memref<32x128xbf16, #tpu.memory_space<vmem>>, vector<32x128xbf16>
    %cst = arith.constant dense<0.000000e+00> : vector<16x128xf32>
    %2 = tpu.matmul %0, %1, %cst {dimension_numbers = #tpu.dot_dimension_numbers<[1], [0], [0], [1], [0, 0, 1, 1], [], []>} : vector<16x32xbf16>, vector<32x128xbf16>, vector<16x128xf32> -> vector<16x128xf32>
    %c0_3 = arith.constant 0 : index
    %c0_4 = arith.constant 0 : index
    %3 = vector.load %arg3[%c0_3, %c0_4] : memref<16x16xbf16, #tpu.memory_space<vmem>>, vector<16x16xbf16>
    %c0_5 = arith.constant 0 : index
    %c0_6 = arith.constant 0 : index
    %4 = vector.load %arg5[%c0_5, %c0_6] : memref<16x128xbf16, #tpu.memory_space<vmem>>, vector<16x128xbf16>
    %cst_7 = arith.constant dense<0.000000e+00> : vector<16x128xf32>
    %5 = tpu.matmul %3, %4, %cst_7 {dimension_numbers = #tpu.dot_dimension_numbers<[1], [0], [0], [1], [0, 0, 1, 1], [], []>} : vector<16x16xbf16>, vector<16x128xbf16>, vector<16x128xf32> -> vector<16x128xf32>
    %6 = arith.addf %2, %5 : vector<16x128xf32>
    %c0_8 = arith.constant 0 : index
    %c0_9 = arith.constant 0 : index
    %7 = vector.load %arg6[%c0_8, %c0_9] : memref<1x128xf32, #tpu.memory_space<vmem>>, vector<1x128xf32>
    %8 = vector.broadcast %7 : vector<1x128xf32> to vector<16x128xf32>
    %9 = arith.addf %6, %8 : vector<16x128xf32>
    %cst_10 = arith.constant 5.000000e-01 : f32
    %10 = vector.broadcast %cst_10 : f32 to vector<16x128xf32>
    %11 = arith.mulf %10, %9 : vector<16x128xf32>
    %12 = arith.maximumf %9, %11 : vector<16x128xf32>
    %c0_11 = arith.constant 0 : index
    %c0_12 = arith.constant 0 : index
    %13 = vector.load %arg7[%c0_11, %c0_12] : memref<16x128xf32, #tpu.memory_space<vmem>>, vector<16x128xf32>
    tpu.vector_store %arg7[%c0_11, %c0_12], %12 {strides = array<i32>} : memref<16x128xf32, #tpu.memory_space<vmem>>, vector<16x128xf32>,
    return
  }
  func.func @transform_0(%arg0: i32, %arg1: i32) -> (i32, i32) {
    %c0_i32 = arith.constant 0 : i32
    %c0_i32_0 = arith.constant 0 : i32
    return %arg0, %c0_i32 : i32, i32
  }
  func.func @transform_1(%arg0: i32, %arg1: i32) -> (i32, i32) {
    %c0_i32 = arith.constant 0 : i32
    %c0_i32_0 = arith.constant 0 : i32
    return %arg0, %c0_i32 : i32, i32
  }
  func.func @transform_2(%arg0: i32, %arg1: i32) -> (i32, i32) {
    %c0_i32 = arith.constant 0 : i32
    %c0_i32_0 = arith.constant 0 : i32
    return %c0_i32, %arg1 : i32, i32
  }
  func.func @transform_3(%arg0: i32, %arg1: i32) -> (i32, i32) {
    %c0_i32 = arith.constant 0 : i32
    %c0_i32_0 = arith.constant 0 : i32
    return %c0_i32, %arg1 : i32, i32
  }
  func.func @transform_4(%arg0: i32, %arg1: i32) -> (i32, i32) {
    %c0_i32 = arith.constant 0 : i32
    %c0_i32_0 = arith.constant 0 : i32
    return %c0_i32, %arg1 : i32, i32
  }
  func.func @transform_5(%arg0: i32, %arg1: i32) -> (i32, i32) {
    %c0_i32 = arith.constant 0 : i32
    return %arg0, %arg1 : i32, i32
  }
}

</mosaic_0001>

<llo_original>
// kernel: tpu_custom_call.1
$region0: #{tpu_custom_call.1}
  #allocation0 [shape = 'u32[]', space=smem, size = 0x4, offset = 0x4, fixed_abs, tag = 'smem constant byte address 0x4 - core index']
  #allocation1 [shape = 'u32[72,128]{1,0:T(1,128)}', space=vmem, size = 0x9000, scoped, tag = 'internal scratch']
  %s0 = inlined_call_operand.hbm [shape: bf16[16,32], index: 0, kind: input, shape index: {}]
  %s1 = inlined_call_operand.hbm [shape: bf16[16,16], index: 1, kind: input, shape index: {}]
  %s2 = inlined_call_operand.hbm [shape: bf16[32,128], index: 2, kind: input, shape index: {}]
  %s3 = inlined_call_operand.hbm [shape: bf16[16,128], index: 3, kind: input, shape index: {}]
  %s4 = inlined_call_operand.vmem [shape: f32[1,128], index: 4, kind: input, shape index: {}]
  %s5 = inlined_call_operand.hbm [shape: f32[16,128], index: 5, kind: output, shape index: {}]
  %s6 = sld [smem:[#allocation0]]
  $region46: #{tpu_custom_call.1} parent=0
    _
  %s8 = ssub.s32 1, %s6
  %s9 = scalar_select 0, %s8, %s6
  $region1: #{tpu_custom_call.1} parent=0
    #allocation2 [shape = 'u8[4096]{0}', space=vmem, size = 0x1000, scoped, tag = 'input window, operand 0, single buffered']
    #allocation3 [shape = 's32[1]{0}', space=sflag, size = 0x4, scoped, tag = 'scoped memory for tpu_custom_call.1']
    #allocation4 [shape = 's32[1]{0}', space=sflag, size = 0x4, scoped, tag = 'scoped memory for tpu_custom_call.1']
    #allocation5 [shape = 'u8[4096]{0}', space=vmem, size = 0x1000, scoped, tag = 'input window, operand 1, single buffered']
    #allocation6 [shape = 's32[1]{0}', space=sflag, size = 0x4, scoped, tag = 'scoped memory for tpu_custom_call.1']
    #allocation7 [shape = 'u8[8192]{0}', space=vmem, size = 0x2000, scoped, tag = 'input window, operand 2, single buffered']
    #allocation8 [shape = 'u8[4096]{0}', space=vmem, size = 0x1000, scoped, tag = 'input window, operand 3, single buffered']
    #allocation9 [shape = 's32[1]{0}', space=sflag, size = 0x4, scoped, tag = 'scoped memory for tpu_custom_call.1']
    #allocation10 [shape = 'u8[8192]{0}', space=vmem, size = 0x2000, scoped, tag = 'output window, operand 0, single buffered']
    %10 = vsyncpa [#allocation3], 0
    %11 = vsyncpa [#allocation6], 0
    %12 = vsyncpa [#allocation9], 0
    %13 = vsyncpa [#allocation4], 0
    // Predicated region
    $region2: #{tpu_custom_call.1} parent=1 // pred_check
      _
    $region3: #{tpu_custom_call.1} parent=1 // pred_check_branch
      %15 = sbr.rel (0) target = $region5
    $region4: #{tpu_custom_call.1} parent=1 // pred_region
      %17 = vsyncadd [#allocation3], 0
      %s18 = sshll.u32 %s0, 4
      %s19 = int_to_ptr.hbm [resolvable:$true] %s18
      %s20 = sshll.u32 [#allocation2], 4
      %s21 = int_to_ptr.vmem [resolvable:$true] %s20
      %26 = dma.hbm_to_vmem [thread:$0]  %s19, 128, %s21, [#allocation3], 64, 64, 4
    $region5: #{tpu_custom_call.1} parent=1 // pred_fallthru
      _
    // Predicated region
    $region6: #{tpu_custom_call.1} parent=1 // pred_check
      _
    $region7: #{tpu_custom_call.1} parent=1 // pred_check_branch
      %28 = sbr.rel (0) target = $region9
    $region8: #{tpu_custom_call.1} parent=1 // pred_region
      %30 = vsyncadd [#allocation6], 0
      %s31 = sshll.u32 %s1, 4
      %s32 = int_to_ptr.hbm [resolvable:$true] %s31
      %s33 = sshll.u32 [#allocation5], 4
      %s34 = int_to_ptr.vmem [resolvable:$true] %s33
      %39 = dma.hbm_to_vmem [thread:$0]  %s32, 128, %s34, [#allocation6], 64, 64, 4
    $region9: #{tpu_custom_call.1} parent=1 // pred_fallthru
      _
    // Predicated region
    $region10: #{tpu_custom_call.1} parent=1 // pred_check
      _
    $region11: #{tpu_custom_call.1} parent=1 // pred_check_branch
      %41 = sbr.rel (0) target = $region13
    $region12: #{tpu_custom_call.1} parent=1 // pred_region
      %43 = vsyncadd [#allocation6], 0
      %s44 = sshll.u32 %s2, 4
      %s45 = int_to_ptr.hbm [resolvable:$true] %s44
      %s46 = sshll.u32 [#allocation7], 4
      %s47 = int_to_ptr.vmem [resolvable:$true] %s46
      %52 = dma.hbm_to_vmem [thread:$0]  %s45, 256, %s47, [#allocation6], 64, 64, 4
    $region13: #{tpu_custom_call.1} parent=1 // pred_fallthru
      _
    // Predicated region
    $region14: #{tpu_custom_call.1} parent=1 // pred_check
      _
    $region15: #{tpu_custom_call.1} parent=1 // pred_check_branch
      %54 = sbr.rel (0) target = $region17
    $region16: #{tpu_custom_call.1} parent=1 // pred_region
      %56 = vsyncadd [#allocation9], 0
      %s57 = sshll.u32 %s3, 4
      %s58 = int_to_ptr.hbm [resolvable:$true] %s57
      %s59 = sshll.u32 [#allocation8], 4
      %s60 = int_to_ptr.vmem [resolvable:$true] %s59
      %65 = dma.hbm_to_vmem [thread:$0]  %s58, 128, %s60, [#allocation9], 64, 64, 4
    $region17: #{tpu_custom_call.1} parent=1 // pred_fallthru
      _
    // Predicated region
    $region18: #{tpu_custom_call.1} parent=1 // pred_check
      _
    $region19: #{tpu_custom_call.1} parent=1 // pred_check_branch
      %67 = sbr.rel (0) target = $region21
    $region20: #{tpu_custom_call.1} parent=1 // pred_region
      _
    $region21: #{tpu_custom_call.1} parent=1 // pred_fallthru
      _
    // Predicated region
    $region22: #{tpu_custom_call.1} parent=1 // pred_check
      _
    $region23: #{tpu_custom_call.1} parent=1 // pred_check_branch
      %69 = sbr.rel (0) target = $region25
    $region24: #{tpu_custom_call.1} parent=1 // pred_region
      %71 = dma.done [#allocation3], 128
    $region25: #{tpu_custom_call.1} parent=1 // pred_fallthru
      _
    // Predicated region
    $region26: #{tpu_custom_call.1} parent=1 // pred_check
      _
    $region27: #{tpu_custom_call.1} parent=1 // pred_check_branch
      %73 = sbr.rel (0) target = $region29
    $region28: #{tpu_custom_call.1} parent=1 // pred_region
      %75 = dma.done [#allocation6], 128
    $region29: #{tpu_custom_call.1} parent=1 // pred_fallthru
      _
    // Predicated region
    $region30: #{tpu_custom_call.1} parent=1 // pred_check
      _
    $region31: #{tpu_custom_call.1} parent=1 // pred_check_branch
      %77 = sbr.rel (0) target = $region33
    $region32: #{tpu_custom_call.1} parent=1 // pred_region
      %79 = dma.done [#allocation6], 256
    $region33: #{tpu_custom_call.1} parent=1 // pred_fallthru
      _
    // Predicated region
    $region34: #{tpu_custom_call.1} parent=1 // pred_check
      _
    $region35: #{tpu_custom_call.1} parent=1 // pred_check_branch
      %81 = sbr.rel (0) target = $region37
    $region36: #{tpu_custom_call.1} parent=1 // pred_region
      %83 = dma.done [#allocation9], 128
    $region37: #{tpu_custom_call.1} parent=1 // pred_fallthru
      _
    %v85 = vld [vmem:[#allocation2] sm:$0xf]
    %v86 = vld [vmem:[#allocation2 + $0x4] sm:$0xf]
    %v87 = vld [vmem:[#allocation7] sm:$0xf]
    %v88 = vld [vmem:[#allocation7 + $0x4] sm:$0xf]
    %v89 = vld [vmem:[#allocation7 + $0x8] sm:$0xf]
    %v90 = vld [vmem:[#allocation7 + $0xc] sm:$0xf]
    %v91 = vld [vmem:[#allocation5] sm:$0xf]
    %v92 = vld [vmem:[#allocation5 + $0x4] sm:$0xf]
    %v93 = vld [vmem:[#allocation8] sm:$0xf]
    %v94 = vld [vmem:[#allocation8 + $0x4] sm:$0xf]
    %v97 = vunpack.c.l.b16 %v91
    %v98 = vunpack.c.l.b16 %v92
    %v99 = vpack.c.b16 %v98, %v97
    %v102 = vunpack.c.l.b16 %v93
    %v103 = vunpack.c.l.b16 %v94
    %v104 = vpack.c.b16 %v103, %v102
    %vm106 = vcmask 130048
    %v108 = vsel %vm106, %v99, 0
    %110 = vmatpush.bf16.msra.mxu0 0
    %111 = vmatpush.bf16.msra.mxu0 0
    %112 = vmatpush.bf16.msra.mxu0 0
    %113 = vmatpush.bf16.msra.mxu0 0
    %114 = vmatpush.bf16.msra.mxu0 0
    %115 = vmatpush.bf16.msra.mxu0 0
    %116 = vmatpush.bf16.msra.mxu0 0
    %117 = vmatpush.bf16.msra.mxu0 %v104
    %118 = vmatmul.bf16.gmra.mxu0 %v108
    %v119 = vpop.f32.mrf.mxu0
    %v120 = vadd.f32 0.0, %v119
    %v121 = vpop.f32.mrf.mxu0
    %v122 = vadd.f32 0.0, %v121
    %123 = vdwg.mxu0
    %v126 = vunpack.c.l.b16 %v85
    %v127 = vunpack.c.l.b16 %v86
    %v128 = vpack.c.b16 %v127, %v126
    %v133 = vunpack.c.l.b16 %v87
    %v134 = vunpack.c.l.b16 %v88
    %v135 = vunpack.c.l.b16 %v89
    %v136 = vunpack.c.l.b16 %v90
    %v137 = vpack.c.b16 %v134, %v133
    %v138 = vpack.c.b16 %v136, %v135
    %vm141 = vcmask 261120
    %v143 = vsel %vm141, %v128, 0
    %145 = vmatpush.bf16.msra.mxu0 0
    %146 = vmatpush.bf16.msra.mxu0 0
    %147 = vmatpush.bf16.msra.mxu0 0
    %148 = vmatpush.bf16.msra.mxu0 0
    %149 = vmatpush.bf16.msra.mxu0 0
    %150 = vmatpush.bf16.msra.mxu0 0
    %151 = vmatpush.bf16.msra.mxu0 %v138
    %152 = vmatpush.bf16.msra.mxu0 %v137
    %153 = vmatmul.bf16.gmra.mxu0 %v143
    %v154 = vpop.f32.mrf.mxu0
    %v155 = vadd.f32 %v120, %v154
    %v156 = vpop.f32.mrf.mxu0
    %v157 = vadd.f32 %v122, %v156
    %158 = vdwg.mxu0
    %v159 = vld [vmem:[%s4] sm:$0x1]
    %v161 = vperm.slane %v159, 0
    %v163 = vadd.f32 %v155, %v161
    %v164 = vadd.f32 %v157, %v161
    %v165 = vmul.f32 %v163, 0.5
    %v166 = vmul.f32 %v164, 0.5
    %v167 = vmax.f32 %v163, %v165
    %v168 = vmax.f32 %v164, %v166
    %169 = vst [vmem:[#allocation10] sm:$0xff] %v167
    %170 = vst [vmem:[#allocation10 + $0x8] sm:$0xff] %v168
    // Predicated region
    $region38: #{tpu_custom_call.1} parent=1 // pred_check
      _
    $region39: #{tpu_custom_call.1} parent=1 // pred_check_branch
      %172 = sbr.rel (0) target = $region41
    $region40: #{tpu_custom_call.1} parent=1 // pred_region
      %174 = vsyncadd [#allocation4], 0
      %s175 = sshll.u32 [#allocation10], 4
      %s176 = int_to_ptr.vmem [resolvable:$true] %s175
      %s177 = sshll.u32 %s5, 4
      %s178 = int_to_ptr.hbm [resolvable:$true] %s177
      %183 = dma.vmem_to_hbm [thread:$0]  %s176, 256, %s178, [#allocation4], 128, 128, 8
    $region41: #{tpu_custom_call.1} parent=1 // pred_fallthru
      _
    // Predicated region
    $region42: #{tpu_custom_call.1} parent=1 // pred_check
      _
    $region43: #{tpu_custom_call.1} parent=1 // pred_check_branch
      %185 = sbr.rel (0) target = $region45
    $region44: #{tpu_custom_call.1} parent=1 // pred_region
      %187 = dma.done [#allocation4], 256
    $region45: #{tpu_custom_call.1} parent=1 // pred_fallthru
      _
    %188 = vsyncpa [#allocation3], 1
    %189 = vsyncpa [#allocation6], 1
    %190 = vsyncpa [#allocation9], 1
    %191 = vsyncpa [#allocation4], 1

</llo_original>
